<compile_context>
chip_gen: v7x
topology: tpu7x:2x2x1
jax: 0.10.0
libtpu: 0.0.40
codegen_flags: <defaults>
</compile_context>

<pallas_src>
import jax
import jax.numpy as jnp
from jax.experimental import pallas as pl
from jax.experimental.pallas import tpu as pltpu


def mlp_kernel(x_ref, w1_ref, b1_ref, w2_ref, b2_ref, w3_ref, b3_ref, o_ref):
    # Feature-major tiles (batch on lanes):
    #   x_ref : (in_dim, TB)  f32
    #   w1_ref: (hid, in_dim) f32    (PyTorch layout: (out_features, in_features))
    #   b1_ref: (hid, 1)      f32
    #   w2_ref: (hid, hid)    bf16
    #   b2_ref: (hid, 1)      f32
    #   w3_ref: (out, hid)    bf16
    #   b3_ref: (out, 1)      f32
    #   o_ref : (out, TB)     f32
    x = x_ref[...]
    w1 = w1_ref[...]
    in_dim = x.shape[0]

    # fc1 + ReLU: K = in_dim (tiny) -> rank-K broadcast FMA on the VPU,
    # bias folded into the first term (no zeros init). Stays f32 (v5e VPU).
    h1 = w1[:, 0:1] * x[0:1, :] + b1_ref[...]
    for k in range(1, in_dim):
        h1 = h1 + w1[:, k:k + 1] * x[k:k + 1, :]
    h1 = jnp.maximum(h1, 0.0)

    # fc2 + ReLU: bf16 MXU operands, f32 accumulation.
    h2 = jnp.dot(w2_ref[...], h1.astype(jnp.bfloat16),
                 preferred_element_type=jnp.float32) + b2_ref[...]
    h2 = jnp.maximum(h2, 0.0)

    # fc3 (no activation): (out, hid) @ (hid, TB) -> (out, TB), lane-dense
    # store at the true output width.
    out = jnp.dot(w3_ref[...], h2.astype(jnp.bfloat16),
                  preferred_element_type=jnp.float32) + b3_ref[...]
    o_ref[...] = out.astype(o_ref.dtype)


def mlp_forward(x, w1, b1, w2, b2, w3, b3, *, block_batch=2048):
    """Forward pass of the MLP.

    x : (batch, in_dim) f32
    w1: (hid, in_dim), b1: (hid,)        -- PyTorch nn.Linear layout
    w2: (hid, hid),    b2: (hid,)
    w3: (out, hid),    b3: (out,)
    returns (batch, out_dim) f32
    """
    batch, in_dim = x.shape
    hid = w1.shape[0]
    out_dim = w3.shape[0]

    # Batch tile: lane dim -> multiple of 128, as large as block_batch allows,
    # but keep >= 2 grid steps whenever batch permits (v7x megacore).
    if batch >= 256:
        half = max(128, ((batch // 2) // 128) * 128)
        tb = min(block_batch, half)
    else:
        tb = 128
    tb = max(128, (tb // 128) * 128)

    padded_batch = pl.cdiv(batch, tb) * tb
    grid = (padded_batch // tb,)

    # Feature-major input: (in_dim, padded_batch); pad rows are zero.
    x_t = jnp.zeros((in_dim, padded_batch), jnp.float32).at[:, :batch].set(x.T)

    # Biases as (features, 1) columns; MXU weights cast to bf16.
    b1c = b1.reshape(hid, 1).astype(jnp.float32)
    b2c = b2.reshape(hid, 1).astype(jnp.float32)
    b3c = b3.reshape(out_dim, 1).astype(jnp.float32)
    w1f = w1.astype(jnp.float32)
    w2b = w2.astype(jnp.bfloat16)
    w3b = w3.astype(jnp.bfloat16)

    # Constant index_map -> DMA'd once, VMEM-resident across grid steps.
    const = lambda shape: pl.BlockSpec(shape, lambda i: (0, 0))

    out_t = pl.pallas_call(
        mlp_kernel,
        out_shape=jax.ShapeDtypeStruct((out_dim, padded_batch), jnp.float32),
        grid=grid,
        in_specs=[
            pl.BlockSpec((in_dim, tb), lambda i: (0, i)),   # x: streamed
            const((hid, in_dim)), const((hid, 1)),          # fc1
            const((hid, hid)), const((hid, 1)),             # fc2
            const((out_dim, hid)), const((out_dim, 1)),     # fc3
        ],
        out_specs=pl.BlockSpec((out_dim, tb), lambda i: (0, i)),
        compiler_params=pltpu.CompilerParams(
            dimension_semantics=("parallel",)),              # megacore on v7x
    )(x_t, w1f, b1c, w2b, b2c, w3b, b3c)

    # (out_dim, padded_batch) -> (batch, out_dim): tiny transpose + unpad.
    return out_t[:, :batch].T


def init_linear_params(key, in_features, out_features):
    # PyTorch nn.Linear-style init: U(-1/sqrt(fan_in), 1/sqrt(fan_in)),
    # weight stored as (out_features, in_features) like torch.
    k_w, k_b = jax.random.split(key)
    bound = 1.0 / jnp.sqrt(jnp.float32(in_features))
    w = jax.random.uniform(k_w, (out_features, in_features), jnp.float32, -bound, bound)
    b = jax.random.uniform(k_b, (out_features,), jnp.float32, -bound, bound)
    return w, b


if __name__ == "__main__":
    input_dim, output_dim, n_hid = 2, 2, 128
    batch = 512                      # TB=256 -> 2 grid steps (exercises megacore path)

    key = jax.random.PRNGKey(0)
    k_x, k1, k2, k3 = jax.random.split(key, 4)

    x = jax.random.normal(k_x, (batch, input_dim), jnp.float32)
    w1, b1 = init_linear_params(k1, input_dim, n_hid)
    w2, b2 = init_linear_params(k2, n_hid, n_hid)
    w3, b3 = init_linear_params(k3, n_hid, output_dim)

    out = mlp_forward(x, w1, b1, w2, b2, w3, b3)
    jax.block_until_ready(out)

    # Pure-JAX f32 reference (same math as the PyTorch module).
    ref = jnp.maximum(x @ w1.T + b1, 0.0)
    ref = jnp.maximum(ref @ w2.T + b2, 0.0)
    ref = ref @ w3.T + b3

    assert out.shape == (batch, output_dim)
    # Tolerance relaxed for bf16 MXU operands (f32 accumulation).
    assert jnp.allclose(out, ref, atol=3e-2, rtol=3e-2), float(jnp.max(jnp.abs(out - ref)))

    print("KERNEL_OK")
</pallas_src>

<mosaic_0001>
module attributes {stable_mosaic.version = 11 : i64} {
  func.func @mlp_kernel(%arg0: i32, %arg1: memref<2x256xf32, #tpu.memory_space<vmem>>, %arg2: memref<128x2xf32, #tpu.memory_space<vmem>>, %arg3: memref<128x1xf32, #tpu.memory_space<vmem>>, %arg4: memref<128x128xbf16, #tpu.memory_space<vmem>>, %arg5: memref<128x1xf32, #tpu.memory_space<vmem>>, %arg6: memref<2x128xbf16, #tpu.memory_space<vmem>>, %arg7: memref<2x1xf32, #tpu.memory_space<vmem>>, %arg8: memref<2x256xf32, #tpu.memory_space<vmem>>) attributes {dimension_semantics = [#tpu.dimension_semantics<parallel>], iteration_bounds = array<i64: 2>, scalar_prefetch = 0 : i64, scratch_operands = 0 : i64, tpu.core_type = #tpu.core_type<tc>, window_params = [{transform_indices = @transform_0, window_bounds = array<i64: 2, 256>}, {pipeline_mode = #tpu.pipeline_mode<synchronous>, transform_indices = @transform_1, window_bounds = array<i64: 128, 2>}, {pipeline_mode = #tpu.pipeline_mode<synchronous>, transform_indices = @transform_2, window_bounds = array<i64: 128, 1>}, {pipeline_mode = #tpu.pipeline_mode<synchronous>, transform_indices = @transform_3, window_bounds = array<i64: 128, 128>}, {pipeline_mode = #tpu.pipeline_mode<synchronous>, transform_indices = @transform_4, window_bounds = array<i64: 128, 1>}, {pipeline_mode = #tpu.pipeline_mode<synchronous>, transform_indices = @transform_5, window_bounds = array<i64: 2, 128>}, {pipeline_mode = #tpu.pipeline_mode<synchronous>, transform_indices = @transform_6, window_bounds = array<i64: 2, 1>}, {transform_indices = @transform_7, window_bounds = array<i64: 2, 256>}]} {
    %c0 = arith.constant 0 : index
    %c0_0 = arith.constant 0 : index
    %0 = vector.load %arg1[%c0, %c0_0] : memref<2x256xf32, #tpu.memory_space<vmem>>, vector<2x256xf32>
    %c0_1 = arith.constant 0 : index
    %c0_2 = arith.constant 0 : index
    %1 = vector.load %arg2[%c0_1, %c0_2] : memref<128x2xf32, #tpu.memory_space<vmem>>, vector<128x2xf32>
    %2 = vector.extract_strided_slice %1 {offsets = [0, 0], sizes = [128, 1], strides = [1, 1]} : vector<128x2xf32> to vector<128x1xf32>
    %3 = vector.extract_strided_slice %0 {offsets = [0, 0], sizes = [1, 256], strides = [1, 1]} : vector<2x256xf32> to vector<1x256xf32>
    %4 = vector.broadcast %2 : vector<128x1xf32> to vector<128x256xf32>
    %5 = vector.broadcast %3 : vector<1x256xf32> to vector<128x256xf32>
    %6 = arith.mulf %4, %5 : vector<128x256xf32>
    %c0_3 = arith.constant 0 : index
    %c0_4 = arith.constant 0 : index
    %7 = vector.load %arg3[%c0_3, %c0_4] : memref<128x1xf32, #tpu.memory_space<vmem>>, vector<128x1xf32>
    %8 = vector.broadcast %7 : vector<128x1xf32> to vector<128x256xf32>
    %9 = arith.addf %6, %8 : vector<128x256xf32>
    %10 = vector.extract_strided_slice %1 {offsets = [0, 1], sizes = [128, 1], strides = [1, 1]} : vector<128x2xf32> to vector<128x1xf32>
    %11 = vector.extract_strided_slice %0 {offsets = [1, 0], sizes = [1, 256], strides = [1, 1]} : vector<2x256xf32> to vector<1x256xf32>
    %12 = vector.broadcast %10 : vector<128x1xf32> to vector<128x256xf32>
    %13 = vector.broadcast %11 : vector<1x256xf32> to vector<128x256xf32>
    %14 = arith.mulf %12, %13 : vector<128x256xf32>
    %15 = arith.addf %9, %14 : vector<128x256xf32>
    %cst = arith.constant 0.000000e+00 : f32
    %16 = vector.broadcast %cst : f32 to vector<128x256xf32>
    %17 = arith.maximumf %15, %16 : vector<128x256xf32>
    %c0_5 = arith.constant 0 : index
    %c0_6 = arith.constant 0 : index
    %18 = vector.load %arg4[%c0_5, %c0_6] : memref<128x128xbf16, #tpu.memory_space<vmem>>, vector<128x128xbf16>
    %19 = arith.truncf %17 : vector<128x256xf32> to vector<128x256xbf16>
    %cst_7 = arith.constant dense<0.000000e+00> : vector<128x256xf32>
    %20 = tpu.matmul %18, %19, %cst_7 {dimension_numbers = #tpu.dot_dimension_numbers<[1], [0], [0], [1], [0, 0, 1, 1], [], []>} : vector<128x128xbf16>, vector<128x256xbf16>, vector<128x256xf32> -> vector<128x256xf32>
    %c0_8 = arith.constant 0 : index
    %c0_9 = arith.constant 0 : index
    %21 = vector.load %arg5[%c0_8, %c0_9] : memref<128x1xf32, #tpu.memory_space<vmem>>, vector<128x1xf32>
    %22 = vector.broadcast %21 : vector<128x1xf32> to vector<128x256xf32>
    %23 = arith.addf %20, %22 : vector<128x256xf32>
    %cst_10 = arith.constant 0.000000e+00 : f32
    %24 = vector.broadcast %cst_10 : f32 to vector<128x256xf32>
    %25 = arith.maximumf %23, %24 : vector<128x256xf32>
    %c0_11 = arith.constant 0 : index
    %c0_12 = arith.constant 0 : index
    %26 = vector.load %arg6[%c0_11, %c0_12] : memref<2x128xbf16, #tpu.memory_space<vmem>>, vector<2x128xbf16>
    %27 = arith.truncf %25 : vector<128x256xf32> to vector<128x256xbf16>
    %cst_13 = arith.constant dense<0.000000e+00> : vector<2x256xf32>
    %28 = tpu.matmul %26, %27, %cst_13 {dimension_numbers = #tpu.dot_dimension_numbers<[1], [0], [0], [1], [0, 0, 1, 1], [], []>} : vector<2x128xbf16>, vector<128x256xbf16>, vector<2x256xf32> -> vector<2x256xf32>
    %c0_14 = arith.constant 0 : index
    %c0_15 = arith.constant 0 : index
    %29 = vector.load %arg7[%c0_14, %c0_15] : memref<2x1xf32, #tpu.memory_space<vmem>>, vector<2x1xf32>
    %30 = vector.broadcast %29 : vector<2x1xf32> to vector<2x256xf32>
    %31 = arith.addf %28, %30 : vector<2x256xf32>
    %c0_16 = arith.constant 0 : index
    %c0_17 = arith.constant 0 : index
    %32 = vector.load %arg8[%c0_16, %c0_17] : memref<2x256xf32, #tpu.memory_space<vmem>>, vector<2x256xf32>
    tpu.vector_store %arg8[%c0_16, %c0_17], %31 {strides = array<i32>} : memref<2x256xf32, #tpu.memory_space<vmem>>, vector<2x256xf32>,
    return
  }
  func.func @transform_0(%arg0: i32) -> (i32, i32) {
    %c0_i32 = arith.constant 0 : i32
    %c0_i32_0 = arith.constant 0 : i32
    return %c0_i32, %arg0 : i32, i32
  }
  func.func @transform_1(%arg0: i32) -> (i32, i32) {
    %c0_i32 = arith.constant 0 : i32
    %c0_i32_0 = arith.constant 0 : i32
    %c0_i32_1 = arith.constant 0 : i32
    return %c0_i32, %c0_i32_0 : i32, i32
  }
  func.func @transform_2(%arg0: i32) -> (i32, i32) {
    %c0_i32 = arith.constant 0 : i32
    %c0_i32_0 = arith.constant 0 : i32
    %c0_i32_1 = arith.constant 0 : i32
    return %c0_i32, %c0_i32_0 : i32, i32
  }
  func.func @transform_3(%arg0: i32) -> (i32, i32) {
    %c0_i32 = arith.constant 0 : i32
    %c0_i32_0 = arith.constant 0 : i32
    %c0_i32_1 = arith.constant 0 : i32
    return %c0_i32, %c0_i32_0 : i32, i32
  }
  func.func @transform_4(%arg0: i32) -> (i32, i32) {
    %c0_i32 = arith.constant 0 : i32
    %c0_i32_0 = arith.constant 0 : i32
    %c0_i32_1 = arith.constant 0 : i32
    return %c0_i32, %c0_i32_0 : i32, i32
  }
  func.func @transform_5(%arg0: i32) -> (i32, i32) {
    %c0_i32 = arith.constant 0 : i32
    %c0_i32_0 = arith.constant 0 : i32
    %c0_i32_1 = arith.constant 0 : i32
    return %c0_i32, %c0_i32_0 : i32, i32
  }
  func.func @transform_6(%arg0: i32) -> (i32, i32) {
    %c0_i32 = arith.constant 0 : i32
    %c0_i32_0 = arith.constant 0 : i32
    %c0_i32_1 = arith.constant 0 : i32
    return %c0_i32, %c0_i32_0 : i32, i32
  }
  func.func @transform_7(%arg0: i32) -> (i32, i32) {
    %c0_i32 = arith.constant 0 : i32
    %c0_i32_0 = arith.constant 0 : i32
    return %c0_i32, %arg0 : i32, i32
  }
}

</mosaic_0001>

<llo_original>
// kernel: tpu_custom_call.1
$region0: #{tpu_custom_call.1}
  #allocation0 [shape = 'u32[]', space=smem, size = 0x4, offset = 0x4, fixed_abs, tag = 'smem constant byte address 0x4 - core index']
  #allocation1 [shape = 'u32[144,128]{1,0:T(1,128)}', space=vmem, size = 0x12000, scoped, tag = 'internal scratch']
  %s0 = inlined_call_operand.vmem [shape: f32[2,512], index: 0, kind: input, shape index: {}]
  %s1 = inlined_call_operand.vmem [shape: f32[128,2], index: 1, kind: input, shape index: {}]
  %s2 = inlined_call_operand.vmem [shape: f32[128,1], index: 2, kind: input, shape index: {}]
  %s3 = inlined_call_operand.vmem [shape: bf16[128,128], index: 3, kind: input, shape index: {}]
  %s4 = inlined_call_operand.vmem [shape: f32[128,1], index: 4, kind: input, shape index: {}]
  %s5 = inlined_call_operand.vmem [shape: bf16[2,128], index: 5, kind: input, shape index: {}]
  %s6 = inlined_call_operand.vmem [shape: f32[2,1], index: 6, kind: input, shape index: {}]
  %s7 = inlined_call_operand.hbm [shape: f32[2,512], index: 7, kind: output, shape index: {}]
  %s8 = sld [smem:[#allocation0]]
  $region61: #{tpu_custom_call.1} parent=0
    _
  %s10 = ssub.s32 1, %s8
  %s11 = scalar_select 0, %s10, %s8
  $region1: #{tpu_custom_call.1} parent=0
    #allocation2 [shape = 'u8[4096]{0}', space=vmem, size = 0x1000, scoped, tag = 'output window, operand 0']
    #allocation3 [shape = 's32[2]{0}', space=sflag, size = 0x8, scoped, tag = 'scoped memory for tpu_custom_call.1']
    %12 = vsyncpa [#allocation3], 0
    %s13 = scalar_lea.sflag [#allocation3], 1
    %14 = vsyncpa %s13, 0
    loop: start=0, step=1, limit=4
    $region2: #{tpu_custom_call.1} parent=1 // loop_pre_header
      _
    $region3: #{tpu_custom_call.1} parent=1 // loop_header
      %s16 = sphi 0, %s20
      %p17 = scmp.ge.s32.totalorder %s16, 4
      %s26 = sphi 0, %s28
      %s29 = sphi 0, %s26
      %s30 = sphi 0, %s29
      %s46 = sphi 0, %s30
      %s50 = sphi 0, %s50
      %s52 = sphi 0, %s50
      %s53 = sphi 0, %s52
      %s67 = sphi 0, %s53
      %s71 = sphi 0, %s71
      %s73 = sphi 0, %s71
      %s74 = sphi 0, %s73
      %s88 = sphi 0, %s74
      %s92 = sphi 0, %s92
      %s94 = sphi 0, %s92
      %s95 = sphi 0, %s94
      %s109 = sphi 0, %s95
      %s113 = sphi 0, %s113
      %s115 = sphi 0, %s113
      %s116 = sphi 0, %s115
      %s130 = sphi 0, %s116
      %s134 = sphi 0, %s134
      %s136 = sphi 0, %s134
      %s137 = sphi 0, %s136
      %s151 = sphi 0, %s137
      %s155 = sphi 0, %s155
      %s157 = sphi 0, %s155
      %s158 = sphi 0, %s157
      %s172 = sphi 0, %s158
      %s178 = sphi 0, %s180
      %s181 = sphi 0, %s178
      %s182 = sphi 0, %s181
      %s198 = sphi 0, %s182
    $region4: #{tpu_custom_call.1} parent=1 // loop_header_branch
      %19 = sbr.rel (%p17) target = $region8
    $region5: #{tpu_custom_call.1} parent=1 // loop_body
      %s21 = ssub.s32 %s16, 1
      %s22 = ssub.s32 %s16, 2
      %s23 = sadd.s32 %s16, 1
      %s24 = ssub.s32 %s16, %s23
      %p25 = scmp.eq.s32.totalorder %s24, 0
      %s27 = sadd.s32 %s26, 1
      %s28 = scalar_select %p25, %s26, %s27
      %p31 = pneg %p25
      %p32 = scmp.eq.s32.totalorder %s16, 1
      %p33 = por %p31, %p32
      %p34 = scmp.ne.s32.totalorder %s26, %s29
      %p35 = scmp.eq.s32.totalorder %s16, 0
      %p36 = por %p34, %p35
      %p37 = scmp.ne.s32.totalorder %s26, %s29
      %p38 = scmp.eq.s32.totalorder %s21, 1
      %p39 = por %p37, %p38
      %p40 = scmp.ne.s32.totalorder %s29, %s30
      %p41 = scmp.eq.s32.totalorder %s21, 0
      %p42 = por %p40, %p41
      %p43 = scmp.ne.s32.totalorder %s29, %s30
      %p44 = scmp.eq.s32.totalorder %s22, 1
      %p45 = por %p43, %p44
      %p47 = scmp.ne.s32.totalorder %s30, %s46
      %p48 = scmp.eq.s32.totalorder %s22, 0
      %p49 = por %p47, %p48
      %s51 = sadd.s32 %s50, 1
      %p54 = scmp.eq.s32.totalorder %s16, 1
      %p55 = scmp.ne.s32.totalorder %s50, %s52
      %p56 = scmp.eq.s32.totalorder %s16, 0
      %p57 = por %p55, %p56
      %p58 = scmp.ne.s32.totalorder %s50, %s52
      %p59 = scmp.eq.s32.totalorder %s21, 1
      %p60 = por %p58, %p59
      %p61 = scmp.ne.s32.totalorder %s52, %s53
      %p62 = scmp.eq.s32.totalorder %s21, 0
      %p63 = por %p61, %p62
      %p64 = scmp.ne.s32.totalorder %s52, %s53
      %p65 = scmp.eq.s32.totalorder %s22, 1
      %p66 = por %p64, %p65
      %p68 = scmp.ne.s32.totalorder %s53, %s67
      %p69 = scmp.eq.s32.totalorder %s22, 0
      %p70 = por %p68, %p69
      %s72 = sadd.s32 %s71, 1
      %p75 = scmp.eq.s32.totalorder %s16, 1
      %p76 = scmp.ne.s32.totalorder %s71, %s73
      %p77 = scmp.eq.s32.totalorder %s16, 0
      %p78 = por %p76, %p77
      %p79 = scmp.ne.s32.totalorder %s71, %s73
      %p80 = scmp.eq.s32.totalorder %s21, 1
      %p81 = por %p79, %p80
      %p82 = scmp.ne.s32.totalorder %s73, %s74
      %p83 = scmp.eq.s32.totalorder %s21, 0
      %p84 = por %p82, %p83
      %p85 = scmp.ne.s32.totalorder %s73, %s74
      %p86 = scmp.eq.s32.totalorder %s22, 1
      %p87 = por %p85, %p86
      %p89 = scmp.ne.s32.totalorder %s74, %s88
      %p90 = scmp.eq.s32.totalorder %s22, 0
      %p91 = por %p89, %p90
      %s93 = sadd.s32 %s92, 1
      %p96 = scmp.eq.s32.totalorder %s16, 1
      %p97 = scmp.ne.s32.totalorder %s92, %s94
      %p98 = scmp.eq.s32.totalorder %s16, 0
      %p99 = por %p97, %p98
      %p100 = scmp.ne.s32.totalorder %s92, %s94
      %p101 = scmp.eq.s32.totalorder %s21, 1
      %p102 = por %p100, %p101
      %p103 = scmp.ne.s32.totalorder %s94, %s95
      %p104 = scmp.eq.s32.totalorder %s21, 0
      %p105 = por %p103, %p104
      %p106 = scmp.ne.s32.totalorder %s94, %s95
      %p107 = scmp.eq.s32.totalorder %s22, 1
      %p108 = por %p106, %p107
      %p110 = scmp.ne.s32.totalorder %s95, %s109
      %p111 = scmp.eq.s32.totalorder %s22, 0
      %p112 = por %p110, %p111
      %s114 = sadd.s32 %s113, 1
      %p117 = scmp.eq.s32.totalorder %s16, 1
      %p118 = scmp.ne.s32.totalorder %s113, %s115
      %p119 = scmp.eq.s32.totalorder %s16, 0
      %p120 = por %p118, %p119
      %p121 = scmp.ne.s32.totalorder %s113, %s115
      %p122 = scmp.eq.s32.totalorder %s21, 1
      %p123 = por %p121, %p122
      %p124 = scmp.ne.s32.totalorder %s115, %s116
      %p125 = scmp.eq.s32.totalorder %s21, 0
      %p126 = por %p124, %p125
      %p127 = scmp.ne.s32.totalorder %s115, %s116
      %p128 = scmp.eq.s32.totalorder %s22, 1
      %p129 = por %p127, %p128
      %p131 = scmp.ne.s32.totalorder %s116, %s130
      %p132 = scmp.eq.s32.totalorder %s22, 0
      %p133 = por %p131, %p132
      %s135 = sadd.s32 %s134, 1
      %p138 = scmp.eq.s32.totalorder %s16, 1
      %p139 = scmp.ne.s32.totalorder %s134, %s136
      %p140 = scmp.eq.s32.totalorder %s16, 0
      %p141 = por %p139, %p140
      %p142 = scmp.ne.s32.totalorder %s134, %s136
      %p143 = scmp.eq.s32.totalorder %s21, 1
      %p144 = por %p142, %p143
      %p145 = scmp.ne.s32.totalorder %s136, %s137
      %p146 = scmp.eq.s32.totalorder %s21, 0
      %p147 = por %p145, %p146
      %p148 = scmp.ne.s32.totalorder %s136, %s137
      %p149 = scmp.eq.s32.totalorder %s22, 1
      %p150 = por %p148, %p149
      %p152 = scmp.ne.s32.totalorder %s137, %s151
      %p153 = scmp.eq.s32.totalorder %s22, 0
      %p154 = por %p152, %p153
      %s156 = sadd.s32 %s155, 1
      %p159 = scmp.eq.s32.totalorder %s16, 1
      %p160 = scmp.ne.s32.totalorder %s155, %s157
      %p161 = scmp.eq.s32.totalorder %s16, 0
      %p162 = por %p160, %p161
      %p163 = scmp.ne.s32.totalorder %s155, %s157
      %p164 = scmp.eq.s32.totalorder %s21, 1
      %p165 = por %p163, %p164
      %p166 = scmp.ne.s32.totalorder %s157, %s158
      %p167 = scmp.eq.s32.totalorder %s21, 0
      %p168 = por %p166, %p167
      %p169 = scmp.ne.s32.totalorder %s157, %s158
      %p170 = scmp.eq.s32.totalorder %s22, 1
      %p171 = por %p169, %p170
      %p173 = scmp.ne.s32.totalorder %s158, %s172
      %p174 = scmp.eq.s32.totalorder %s22, 0
      %p175 = por %p173, %p174
      %s176 = ssub.s32 %s16, %s23
      %p177 = scmp.eq.s32.totalorder %s176, 0
      %s179 = sadd.s32 %s178, 1
      %s180 = scalar_select %p177, %s178, %s179
      %p183 = pneg %p177
      %p184 = scmp.eq.s32.totalorder %s16, 1
      %p185 = por %p183, %p184
      %p186 = scmp.ne.s32.totalorder %s178, %s181
      %p187 = scmp.eq.s32.totalorder %s16, 0
      %p188 = por %p186, %p187
      %p189 = scmp.ne.s32.totalorder %s178, %s181
      %p190 = scmp.eq.s32.totalorder %s21, 1
      %p191 = por %p189, %p190
      %p192 = scmp.ne.s32.totalorder %s181, %s182
      %p193 = scmp.eq.s32.totalorder %s21, 0
      %p194 = por %p192, %p193
      %p195 = scmp.ne.s32.totalorder %s181, %s182
      %p196 = scmp.eq.s32.totalorder %s22, 1
      %p197 = por %p195, %p196
      %p199 = scmp.ne.s32.totalorder %s182, %s198
      %p200 = scmp.eq.s32.totalorder %s22, 0
      %p201 = por %p199, %p200
      %p202 = scmp.le.s32.totalorder 1, %s16
      %p203 = scmp.lt.s32.totalorder %s16, 3
      %p204 = pnand %p202, %p203
      %p205 = pneg %p204
      // Predicated region
      $region9: #{tpu_custom_call.1} parent=5 // pred_check
        _
      $region10: #{tpu_custom_call.1} parent=5 // pred_check_branch
        %207 = sbr.rel (%p204) target = $region12
      $region11: #{tpu_custom_call.1} parent=5 // pred_region
        %s208 = ssub.s32 %s16, 1
        // Predicated region
        $region13: #{tpu_custom_call.1} parent=11 // pred_check
          %p209 = pneg %p63
        $region14: #{tpu_custom_call.1} parent=11 // pred_check_branch
          %211 = sbr.rel (%p209) target = $region16
        $region15: #{tpu_custom_call.1} parent=11 // pred_region
          _
        $region16: #{tpu_custom_call.1} parent=11 // pred_fallthru
          _
        // Predicated region
        $region17: #{tpu_custom_call.1} parent=11 // pred_check
          %p212 = pneg %p84
        $region18: #{tpu_custom_call.1} parent=11 // pred_check_branch
          %214 = sbr.rel (%p212) target = $region20
        $region19: #{tpu_custom_call.1} parent=11 // pred_region
          _
        $region20: #{tpu_custom_call.1} parent=11 // pred_fallthru
          _
        // Predicated region
        $region21: #{tpu_custom_call.1} parent=11 // pred_check
          %p215 = pneg %p105
        $region22: #{tpu_custom_call.1} parent=11 // pred_check_branch
          %217 = sbr.rel (%p215) target = $region24
        $region23: #{tpu_custom_call.1} parent=11 // pred_region
          _
        $region24: #{tpu_custom_call.1} parent=11 // pred_fallthru
          _
        // Predicated region
        $region25: #{tpu_custom_call.1} parent=11 // pred_check
          %p218 = pneg %p126
        $region26: #{tpu_custom_call.1} parent=11 // pred_check_branch
          %220 = sbr.rel (%p218) target = $region28
        $region27: #{tpu_custom_call.1} parent=11 // pred_region
          _
        $region28: #{tpu_custom_call.1} parent=11 // pred_fallthru
          _
        // Predicated region
        $region29: #{tpu_custom_call.1} parent=11 // pred_check
          %p221 = pneg %p147
        $region30: #{tpu_custom_call.1} parent=11 // pred_check_branch
          %223 = sbr.rel (%p221) target = $region32
        $region31: #{tpu_custom_call.1} parent=11 // pred_region
          _
        $region32: #{tpu_custom_call.1} parent=11 // pred_fallthru
          _
        // Predicated region
        $region33: #{tpu_custom_call.1} parent=11 // pred_check
          %p224 = pneg %p168
        $region34: #{tpu_custom_call.1} parent=11 // pred_check_branch
          %226 = sbr.rel (%p224) target = $region36
        $region35: #{tpu_custom_call.1} parent=11 // pred_region
          _
        $region36: #{tpu_custom_call.1} parent=11 // pred_fallthru
          _
      $region12: #{tpu_custom_call.1} parent=5 // pred_fallthru
        _
      %p227 = scmp.lt.s32.totalorder %s16, 2
      // Predicated region
      $region37: #{tpu_custom_call.1} parent=5 // pred_check
        %p228 = pneg %p227
      $region38: #{tpu_custom_call.1} parent=5 // pred_check_branch
        %230 = sbr.rel (%p228) target = $region40
      $region39: #{tpu_custom_call.1} parent=5 // pred_region
        // Predicated region
        $region41: #{tpu_custom_call.1} parent=39 // pred_check
          %p231 = pneg %p36
        $region42: #{tpu_custom_call.1} parent=39 // pred_check_branch
          %233 = sbr.rel (%p231) target = $region44
        $region43: #{tpu_custom_call.1} parent=39 // pred_region
          %s234 = smul.u32 2, %s16
          %p235 = scmp.lt.s32.totalorder %s234, 3
          %s236 = scalar_select %p235, %s234, 3
          %s237 = smul.addr %s236, 2
          %s238 = scalar_lea.vmem %s0, %s237
          %s239 = smul.u32 2, %s16
        $region44: #{tpu_custom_call.1} parent=39 // pred_fallthru
          _
      $region40: #{tpu_custom_call.1} parent=5 // pred_fallthru
        _
      %p240 = scmp.le.s32.totalorder 1, %s16
      %p241 = scmp.lt.s32.totalorder %s16, 3
      %p242 = pnand %p240, %p241
      %p243 = pneg %p242
      // Predicated region
      $region45: #{tpu_custom_call.1} parent=5 // pred_check
        _
      $region46: #{tpu_custom_call.1} parent=5 // pred_check_branch
        %245 = sbr.rel (%p242) target = $region48
      $region47: #{tpu_custom_call.1} parent=5 // pred_region
        %s246 = ssub.s32 %s16, 1
        %s247 = smul.u32 2, %s21
        %p248 = scmp.lt.s32.totalorder %s247, 3
        %s249 = scalar_select %p248, %s247, 3
        %s250 = smul.addr %s249, 2
        %s251 = scalar_lea.vmem %s0, %s250
        %p252 = pneg %p42
        %p253 = pneg %p39
        %p254 = pneg %p63
        %p255 = pneg %p60
        %p256 = pneg %p84
        %p257 = pneg %p81
        %p258 = pneg %p105
        %p259 = pneg %p102
        %p260 = pneg %p126
        %p261 = pneg %p123
        %p262 = pneg %p147
        %p263 = pneg %p144
        %p264 = pneg %p168
        %p265 = pneg %p165
        %p266 = pneg %p194
        %p267 = pneg %p191
        %s268 = sand.u32 %s181, 1
        %s269 = scalar_lea.sflag [#allocation3], %s268
        %s270 = sand.u32 %s181, 1
        %s271 = smul.addr %s270, 4
        %s272 = scalar_lea.vmem [#allocation2], %s271
        %s273 = smul.u32 2, %s21
        %p274 = scmp.lt.s32.totalorder %s273, 3
        %s275 = scalar_select %p274, %s273, 3
        %s276 = smul.addr %s275, 2
        %s277 = scalar_lea.vmem %s0, %s276
        %s278 = smul.u32 2, %s21
        %s279 = smul.u32 2, %s21
        %v281 = vld [vmem:[%s277] sm:$0xf]
        %v282 = vld [vmem:[%s1] sm:$0xff]
        %v283 = vld [vmem:[%s1 + $0x8] sm:$0xff]
        %v284 = vld [vmem:[%s1 + $0x10] sm:$0xff]
        %v285 = vld [vmem:[%s1 + $0x18] sm:$0xff]
        %v286 = vld [vmem:[%s1 + $0x20] sm:$0xff]
        %v287 = vld [vmem:[%s1 + $0x28] sm:$0xff]
        %v288 = vld [vmem:[%s1 + $0x30] sm:$0xff]
        %v289 = vld [vmem:[%s1 + $0x38] sm:$0xff]
        %v290 = vld [vmem:[%s1 + $0x40] sm:$0xff]
        %v291 = vld [vmem:[%s1 + $0x48] sm:$0xff]
        %v292 = vld [vmem:[%s1 + $0x50] sm:$0xff]
        %v293 = vld [vmem:[%s1 + $0x58] sm:$0xff]
        %v294 = vld [vmem:[%s1 + $0x60] sm:$0xff]
        %v295 = vld [vmem:[%s1 + $0x68] sm:$0xff]
        %v296 = vld [vmem:[%s1 + $0x70] sm:$0xff]
        %v297 = vld [vmem:[%s1 + $0x78] sm:$0xff]
        %299 = vset.pattern.permute.xlu0 0
        %300 = vperm.xlu0 %299, %v282
        %v301 = vpop.permute.xlu0 %300
        %304 = vset.pattern.permute.xlu0 0
        %305 = vperm.xlu0 %304, %v283
        %v306 = vpop.permute.xlu0 %305
        %309 = vset.pattern.permute.xlu0 0
        %310 = vperm.xlu0 %309, %v284
        %v311 = vpop.permute.xlu0 %310
        %314 = vset.pattern.permute.xlu0 0
        %315 = vperm.xlu0 %314, %v285
        %v316 = vpop.permute.xlu0 %315
        %319 = vset.pattern.permute.xlu0 0
        %320 = vperm.xlu0 %319, %v286
        %v321 = vpop.permute.xlu0 %320
        %324 = vset.pattern.permute.xlu0 0
        %325 = vperm.xlu0 %324, %v287
        %v326 = vpop.permute.xlu0 %325
        %329 = vset.pattern.permute.xlu0 0
        %330 = vperm.xlu0 %329, %v288
        %v331 = vpop.permute.xlu0 %330
        %334 = vset.pattern.permute.xlu0 0
        %335 = vperm.xlu0 %334, %v289
        %v336 = vpop.permute.xlu0 %335
        %339 = vset.pattern.permute.xlu0 0
        %340 = vperm.xlu0 %339, %v290
        %v341 = vpop.permute.xlu0 %340
        %344 = vset.pattern.permute.xlu0 0
        %345 = vperm.xlu0 %344, %v291
        %v346 = vpop.permute.xlu0 %345
        %349 = vset.pattern.permute.xlu0 0
        %350 = vperm.xlu0 %349, %v292
        %v351 = vpop.permute.xlu0 %350
        %354 = vset.pattern.permute.xlu0 0
        %355 = vperm.xlu0 %354, %v293
        %v356 = vpop.permute.xlu0 %355
        %359 = vset.pattern.permute.xlu0 0
        %360 = vperm.xlu0 %359, %v294
        %v361 = vpop.permute.xlu0 %360
        %364 = vset.pattern.permute.xlu0 0
        %365 = vperm.xlu0 %364, %v295
        %v366 = vpop.permute.xlu0 %365
        %369 = vset.pattern.permute.xlu0 0
        %370 = vperm.xlu0 %369, %v296
        %v371 = vpop.permute.xlu0 %370
        %374 = vset.pattern.permute.xlu0 0
        %375 = vperm.xlu0 %374, %v297
        %v376 = vpop.permute.xlu0 %375
        %v379 = vlaneseq
        %v380 = vshrl.u32 %v379, 7
        %v381 = vsub.s32 0, %v380
        %v382 = vrot.slane %v281, %v381
        %v383 = vlaneseq
        %v384 = vshrl.u32 %v383, 7
        %v385 = vsub.s32 2, %v384
        %v386 = vrot.slane %v281, %v385
        %v389 = vlaneseq
        %v390 = vshrl.u32 %v389, 7
        %v391 = vsub.s32 0, %v390
        %v392 = vrot.slane %v382, %v391
        %v393 = vlaneseq
        %v394 = vshrl.u32 %v393, 7
        %v395 = vsub.s32 0, %v394
        %v396 = vrot.slane %v386, %v395
        %v397 = vmul.f32 %v301, %v392
        %v398 = vmul.f32 %v301, %v396
        %v399 = vmul.f32 %v306, %v392
        %v400 = vmul.f32 %v306, %v396
        %v401 = vmul.f32 %v311, %v392
        %v402 = vmul.f32 %v311, %v396
        %v403 = vmul.f32 %v316, %v392
        %v404 = vmul.f32 %v316, %v396
        %v405 = vmul.f32 %v321, %v392
        %v406 = vmul.f32 %v321, %v396
        %v407 = vmul.f32 %v326, %v392
        %v408 = vmul.f32 %v326, %v396
        %v409 = vmul.f32 %v331, %v392
        %v410 = vmul.f32 %v331, %v396
        %v411 = vmul.f32 %v336, %v392
        %v412 = vmul.f32 %v336, %v396
        %v413 = vmul.f32 %v341, %v392
        %v414 = vmul.f32 %v341, %v396
        %v415 = vmul.f32 %v346, %v392
        %v416 = vmul.f32 %v346, %v396
        %v417 = vmul.f32 %v351, %v392
        %v418 = vmul.f32 %v351, %v396
        %v419 = vmul.f32 %v356, %v392
        %v420 = vmul.f32 %v356, %v396
        %v421 = vmul.f32 %v361, %v392
        %v422 = vmul.f32 %v361, %v396
        %v423 = vmul.f32 %v366, %v392
        %v424 = vmul.f32 %v366, %v396
        %v425 = vmul.f32 %v371, %v392
        %v426 = vmul.f32 %v371, %v396
        %v427 = vmul.f32 %v376, %v392
        %v428 = vmul.f32 %v376, %v396
        %v429 = vld [vmem:[%s2] sm:$0xff]
        %v430 = vld [vmem:[%s2 + $0x8] sm:$0xff]
        %v431 = vld [vmem:[%s2 + $0x10] sm:$0xff]
        %v432 = vld [vmem:[%s2 + $0x18] sm:$0xff]
        %v433 = vld [vmem:[%s2 + $0x20] sm:$0xff]
        %v434 = vld [vmem:[%s2 + $0x28] sm:$0xff]
        %v435 = vld [vmem:[%s2 + $0x30] sm:$0xff]
        %v436 = vld [vmem:[%s2 + $0x38] sm:$0xff]
        %v437 = vld [vmem:[%s2 + $0x40] sm:$0xff]
        %v438 = vld [vmem:[%s2 + $0x48] sm:$0xff]
        %v439 = vld [vmem:[%s2 + $0x50] sm:$0xff]
        %v440 = vld [vmem:[%s2 + $0x58] sm:$0xff]
        %v441 = vld [vmem:[%s2 + $0x60] sm:$0xff]
        %v442 = vld [vmem:[%s2 + $0x68] sm:$0xff]
        %v443 = vld [vmem:[%s2 + $0x70] sm:$0xff]
        %v444 = vld [vmem:[%s2 + $0x78] sm:$0xff]
        %446 = vset.pattern.permute.xlu0 0
        %447 = vperm.xlu0 %446, %v429
        %v448 = vpop.permute.xlu0 %447
        %451 = vset.pattern.permute.xlu0 0
        %452 = vperm.xlu0 %451, %v430
        %v453 = vpop.permute.xlu0 %452
        %456 = vset.pattern.permute.xlu0 0
        %457 = vperm.xlu0 %456, %v431
        %v458 = vpop.permute.xlu0 %457
        %461 = vset.pattern.permute.xlu0 0
        %462 = vperm.xlu0 %461, %v432
        %v463 = vpop.permute.xlu0 %462
        %466 = vset.pattern.permute.xlu0 0
        %467 = vperm.xlu0 %466, %v433
        %v468 = vpop.permute.xlu0 %467
        %471 = vset.pattern.permute.xlu0 0
        %472 = vperm.xlu0 %471, %v434
        %v473 = vpop.permute.xlu0 %472
        %476 = vset.pattern.permute.xlu0 0
        %477 = vperm.xlu0 %476, %v435
        %v478 = vpop.permute.xlu0 %477
        %481 = vset.pattern.permute.xlu0 0
        %482 = vperm.xlu0 %481, %v436
        %v483 = vpop.permute.xlu0 %482
        %486 = vset.pattern.permute.xlu0 0
        %487 = vperm.xlu0 %486, %v437
        %v488 = vpop.permute.xlu0 %487
        %491 = vset.pattern.permute.xlu0 0
        %492 = vperm.xlu0 %491, %v438
        %v493 = vpop.permute.xlu0 %492
        %496 = vset.pattern.permute.xlu0 0
        %497 = vperm.xlu0 %496, %v439
        %v498 = vpop.permute.xlu0 %497
        %501 = vset.pattern.permute.xlu0 0
        %502 = vperm.xlu0 %501, %v440
        %v503 = vpop.permute.xlu0 %502
        %506 = vset.pattern.permute.xlu0 0
        %507 = vperm.xlu0 %506, %v441
        %v508 = vpop.permute.xlu0 %507
        %511 = vset.pattern.permute.xlu0 0
        %512 = vperm.xlu0 %511, %v442
        %v513 = vpop.permute.xlu0 %512
        %516 = vset.pattern.permute.xlu0 0
        %517 = vperm.xlu0 %516, %v443
        %v518 = vpop.permute.xlu0 %517
        %521 = vset.pattern.permute.xlu0 0
        %522 = vperm.xlu0 %521, %v444
        %v523 = vpop.permute.xlu0 %522
        %v525 = vadd.f32 %v397, %v448
        %v526 = vadd.f32 %v398, %v448
        %v527 = vadd.f32 %v399, %v453
        %v528 = vadd.f32 %v400, %v453
        %v529 = vadd.f32 %v401, %v458
        %v530 = vadd.f32 %v402, %v458
        %v531 = vadd.f32 %v403, %v463
        %v532 = vadd.f32 %v404, %v463
        %v533 = vadd.f32 %v405, %v468
        %v534 = vadd.f32 %v406, %v468
        %v535 = vadd.f32 %v407, %v473
        %v536 = vadd.f32 %v408, %v473
        %v537 = vadd.f32 %v409, %v478
        %v538 = vadd.f32 %v410, %v478
        %v539 = vadd.f32 %v411, %v483
        %v540 = vadd.f32 %v412, %v483
        %v541 = vadd.f32 %v413, %v488
        %v542 = vadd.f32 %v414, %v488
        %v543 = vadd.f32 %v415, %v493
        %v544 = vadd.f32 %v416, %v493
        %v545 = vadd.f32 %v417, %v498
        %v546 = vadd.f32 %v418, %v498
        %v547 = vadd.f32 %v419, %v503
        %v548 = vadd.f32 %v420, %v503
        %v549 = vadd.f32 %v421, %v508
        %v550 = vadd.f32 %v422, %v508
        %v551 = vadd.f32 %v423, %v513
        %v552 = vadd.f32 %v424, %v513
        %v553 = vadd.f32 %v425, %v518
        %v554 = vadd.f32 %v426, %v518
        %v555 = vadd.f32 %v427, %v523
        %v556 = vadd.f32 %v428, %v523
        %557 = vset.pattern.permute.xlu0 1
        %558 = vperm.xlu0 %557, %v282
        %v559 = vpop.permute.xlu0 %558
        %561 = vset.pattern.permute.xlu0 1
        %562 = vperm.xlu0 %561, %v283
        %v563 = vpop.permute.xlu0 %562
        %565 = vset.pattern.permute.xlu0 1
        %566 = vperm.xlu0 %565, %v284
        %v567 = vpop.permute.xlu0 %566
        %569 = vset.pattern.permute.xlu0 1
        %570 = vperm.xlu0 %569, %v285
        %v571 = vpop.permute.xlu0 %570
        %573 = vset.pattern.permute.xlu0 1
        %574 = vperm.xlu0 %573, %v286
        %v575 = vpop.permute.xlu0 %574
        %577 = vset.pattern.permute.xlu0 1
        %578 = vperm.xlu0 %577, %v287
        %v579 = vpop.permute.xlu0 %578
        %581 = vset.pattern.permute.xlu0 1
        %582 = vperm.xlu0 %581, %v288
        %v583 = vpop.permute.xlu0 %582
        %585 = vset.pattern.permute.xlu0 1
        %586 = vperm.xlu0 %585, %v289
        %v587 = vpop.permute.xlu0 %586
        %589 = vset.pattern.permute.xlu0 1
        %590 = vperm.xlu0 %589, %v290
        %v591 = vpop.permute.xlu0 %590
        %593 = vset.pattern.permute.xlu0 1
        %594 = vperm.xlu0 %593, %v291
        %v595 = vpop.permute.xlu0 %594
        %597 = vset.pattern.permute.xlu0 1
        %598 = vperm.xlu0 %597, %v292
        %v599 = vpop.permute.xlu0 %598
        %601 = vset.pattern.permute.xlu0 1
        %602 = vperm.xlu0 %601, %v293
        %v603 = vpop.permute.xlu0 %602
        %605 = vset.pattern.permute.xlu0 1
        %606 = vperm.xlu0 %605, %v294
        %v607 = vpop.permute.xlu0 %606
        %609 = vset.pattern.permute.xlu0 1
        %610 = vperm.xlu0 %609, %v295
        %v611 = vpop.permute.xlu0 %610
        %613 = vset.pattern.permute.xlu0 1
        %614 = vperm.xlu0 %613, %v296
        %v615 = vpop.permute.xlu0 %614
        %617 = vset.pattern.permute.xlu0 1
        %618 = vperm.xlu0 %617, %v297
        %v619 = vpop.permute.xlu0 %618
        %v621 = vlaneseq
        %v622 = vshrl.u32 %v621, 7
        %v623 = vsub.s32 1, %v622
        %v624 = vrot.slane %v281, %v623
        %v625 = vlaneseq
        %v626 = vshrl.u32 %v625, 7
        %v627 = vsub.s32 3, %v626
        %v628 = vrot.slane %v281, %v627
        %v631 = vlaneseq
        %v632 = vshrl.u32 %v631, 7
        %v633 = vsub.s32 1, %v632
        %v634 = vrot.slane %v624, %v633
        %v635 = vlaneseq
        %v636 = vshrl.u32 %v635, 7
        %v637 = vsub.s32 1, %v636
        %v638 = vrot.slane %v628, %v637
        %v639 = vmul.f32 %v559, %v634
        %v640 = vmul.f32 %v559, %v638
        %v641 = vmul.f32 %v563, %v634
        %v642 = vmul.f32 %v563, %v638
        %v643 = vmul.f32 %v567, %v634
        %v644 = vmul.f32 %v567, %v638
        %v645 = vmul.f32 %v571, %v634
        %v646 = vmul.f32 %v571, %v638
        %v647 = vmul.f32 %v575, %v634
        %v648 = vmul.f32 %v575, %v638
        %v649 = vmul.f32 %v579, %v634
        %v650 = vmul.f32 %v579, %v638
        %v651 = vmul.f32 %v583, %v634
        %v652 = vmul.f32 %v583, %v638
        %v653 = vmul.f32 %v587, %v634
        %v654 = vmul.f32 %v587, %v638
        %v655 = vmul.f32 %v591, %v634
        %v656 = vmul.f32 %v591, %v638
        %v657 = vmul.f32 %v595, %v634
        %v658 = vmul.f32 %v595, %v638
        %v659 = vmul.f32 %v599, %v634
        %v660 = vmul.f32 %v599, %v638
        %v661 = vmul.f32 %v603, %v634
        %v662 = vmul.f32 %v603, %v638
        %v663 = vmul.f32 %v607, %v634
        %v664 = vmul.f32 %v607, %v638
        %v665 = vmul.f32 %v611, %v634
        %v666 = vmul.f32 %v611, %v638
        %v667 = vmul.f32 %v615, %v634
        %v668 = vmul.f32 %v615, %v638
        %v669 = vmul.f32 %v619, %v634
        %v670 = vmul.f32 %v619, %v638
        %v671 = vadd.f32 %v525, %v639
        %v672 = vadd.f32 %v526, %v640
        %v673 = vadd.f32 %v527, %v641
        %v674 = vadd.f32 %v528, %v642
        %v675 = vadd.f32 %v529, %v643
        %v676 = vadd.f32 %v530, %v644
        %v677 = vadd.f32 %v531, %v645
        %v678 = vadd.f32 %v532, %v646
        %v679 = vadd.f32 %v533, %v647
        %v680 = vadd.f32 %v534, %v648
        %v681 = vadd.f32 %v535, %v649
        %v682 = vadd.f32 %v536, %v650
        %v683 = vadd.f32 %v537, %v651
        %v684 = vadd.f32 %v538, %v652
        %v685 = vadd.f32 %v539, %v653
        %v686 = vadd.f32 %v540, %v654
        %v687 = vadd.f32 %v541, %v655
        %v688 = vadd.f32 %v542, %v656
        %v689 = vadd.f32 %v543, %v657
        %v690 = vadd.f32 %v544, %v658
        %v691 = vadd.f32 %v545, %v659
        %v692 = vadd.f32 %v546, %v660
        %v693 = vadd.f32 %v547, %v661
        %v694 = vadd.f32 %v548, %v662
        %v695 = vadd.f32 %v549, %v663
        %v696 = vadd.f32 %v550, %v664
        %v697 = vadd.f32 %v551, %v665
        %v698 = vadd.f32 %v552, %v666
        %v699 = vadd.f32 %v553, %v667
        %v700 = vadd.f32 %v554, %v668
        %v701 = vadd.f32 %v555, %v669
        %v702 = vadd.f32 %v556, %v670
        %v703 = vmax.f32 %v671, 0.0
        %v704 = vmax.f32 %v672, 0.0
        %v705 = vmax.f32 %v673, 0.0
        %v706 = vmax.f32 %v674, 0.0
        %v707 = vmax.f32 %v675, 0.0
        %v708 = vmax.f32 %v676, 0.0
        %v709 = vmax.f32 %v677, 0.0
        %v710 = vmax.f32 %v678, 0.0
        %v711 = vmax.f32 %v679, 0.0
        %v712 = vmax.f32 %v680, 0.0
        %v713 = vmax.f32 %v681, 0.0
        %v714 = vmax.f32 %v682, 0.0
        %v715 = vmax.f32 %v683, 0.0
        %v716 = vmax.f32 %v684, 0.0
        %v717 = vmax.f32 %v685, 0.0
        %v718 = vmax.f32 %v686, 0.0
        %v719 = vmax.f32 %v687, 0.0
        %v720 = vmax.f32 %v688, 0.0
        %v721 = vmax.f32 %v689, 0.0
        %v722 = vmax.f32 %v690, 0.0
        %v723 = vmax.f32 %v691, 0.0
        %v724 = vmax.f32 %v692, 0.0
        %v725 = vmax.f32 %v693, 0.0
        %v726 = vmax.f32 %v694, 0.0
        %v727 = vmax.f32 %v695, 0.0
        %v728 = vmax.f32 %v696, 0.0
        %v729 = vmax.f32 %v697, 0.0
        %v730 = vmax.f32 %v698, 0.0
        %v731 = vmax.f32 %v699, 0.0
        %v732 = vmax.f32 %v700, 0.0
        %v733 = vmax.f32 %v701, 0.0
        %v734 = vmax.f32 %v702, 0.0
        %v735 = vld [vmem:[%s3] sm:$0xf]
        %v736 = vld [vmem:[%s3 + $0x4] sm:$0xf]
        %v737 = vld [vmem:[%s3 + $0x8] sm:$0xf]
        %v738 = vld [vmem:[%s3 + $0xc] sm:$0xf]
        %v739 = vld [vmem:[%s3 + $0x10] sm:$0xf]
        %v740 = vld [vmem:[%s3 + $0x14] sm:$0xf]
        %v741 = vld [vmem:[%s3 + $0x18] sm:$0xf]
        %v742 = vld [vmem:[%s3 + $0x1c] sm:$0xf]
        %v743 = vld [vmem:[%s3 + $0x20] sm:$0xf]
        %v744 = vld [vmem:[%s3 + $0x24] sm:$0xf]
        %v745 = vld [vmem:[%s3 + $0x28] sm:$0xf]
        %v746 = vld [vmem:[%s3 + $0x2c] sm:$0xf]
        %v747 = vld [vmem:[%s3 + $0x30] sm:$0xf]
        %v748 = vld [vmem:[%s3 + $0x34] sm:$0xf]
        %v749 = vld [vmem:[%s3 + $0x38] sm:$0xf]
        %v750 = vld [vmem:[%s3 + $0x3c] sm:$0xf]
        %v751 = vpack.c.bf16 %v705, %v703
        %v752 = vpack.c.bf16 %v706, %v704
        %v753 = vpack.c.bf16 %v709, %v707
        %v754 = vpack.c.bf16 %v710, %v708
        %v755 = vpack.c.bf16 %v713, %v711
        %v756 = vpack.c.bf16 %v714, %v712
        %v757 = vpack.c.bf16 %v717, %v715
        %v758 = vpack.c.bf16 %v718, %v716
        %v759 = vpack.c.bf16 %v721, %v719
        %v760 = vpack.c.bf16 %v722, %v720
        %v761 = vpack.c.bf16 %v725, %v723
        %v762 = vpack.c.bf16 %v726, %v724
        %v763 = vpack.c.bf16 %v729, %v727
        %v764 = vpack.c.bf16 %v730, %v728
        %v765 = vpack.c.bf16 %v733, %v731
        %v766 = vpack.c.bf16 %v734, %v732
        %v767 = vld [vmem:[%s4] sm:$0xff]
        %v768 = vld [vmem:[%s4 + $0x8] sm:$0xff]
        %v769 = vld [vmem:[%s4 + $0x10] sm:$0xff]
        %v770 = vld [vmem:[%s4 + $0x18] sm:$0xff]
        %v771 = vld [vmem:[%s4 + $0x20] sm:$0xff]
        %v772 = vld [vmem:[%s4 + $0x28] sm:$0xff]
        %v773 = vld [vmem:[%s4 + $0x30] sm:$0xff]
        %v774 = vld [vmem:[%s4 + $0x38] sm:$0xff]
        %v775 = vld [vmem:[%s4 + $0x40] sm:$0xff]
        %v776 = vld [vmem:[%s4 + $0x48] sm:$0xff]
        %v777 = vld [vmem:[%s4 + $0x50] sm:$0xff]
        %v778 = vld [vmem:[%s4 + $0x58] sm:$0xff]
        %v779 = vld [vmem:[%s4 + $0x60] sm:$0xff]
        %v780 = vld [vmem:[%s4 + $0x68] sm:$0xff]
        %v781 = vld [vmem:[%s4 + $0x70] sm:$0xff]
        %v782 = vld [vmem:[%s4 + $0x78] sm:$0xff]
        %784 = vset.pattern.permute.xlu0 0
        %785 = vperm.xlu0 %784, %v767
        %v786 = vpop.permute.xlu0 %785
        %789 = vset.pattern.permute.xlu0 0
        %790 = vperm.xlu0 %789, %v768
        %v791 = vpop.permute.xlu0 %790
        %794 = vset.pattern.permute.xlu0 0
        %795 = vperm.xlu0 %794, %v769
        %v796 = vpop.permute.xlu0 %795
        %799 = vset.pattern.permute.xlu0 0
        %800 = vperm.xlu0 %799, %v770
        %v801 = vpop.permute.xlu0 %800
        %804 = vset.pattern.permute.xlu0 0
        %805 = vperm.xlu0 %804, %v771
        %v806 = vpop.permute.xlu0 %805
        %809 = vset.pattern.permute.xlu0 0
        %810 = vperm.xlu0 %809, %v772
        %v811 = vpop.permute.xlu0 %810
        %814 = vset.pattern.permute.xlu0 0
        %815 = vperm.xlu0 %814, %v773
        %v816 = vpop.permute.xlu0 %815
        %819 = vset.pattern.permute.xlu0 0
        %820 = vperm.xlu0 %819, %v774
        %v821 = vpop.permute.xlu0 %820
        %824 = vset.pattern.permute.xlu0 0
        %825 = vperm.xlu0 %824, %v775
        %v826 = vpop.permute.xlu0 %825
        %829 = vset.pattern.permute.xlu0 0
        %830 = vperm.xlu0 %829, %v776
        %v831 = vpop.permute.xlu0 %830
        %834 = vset.pattern.permute.xlu0 0
        %835 = vperm.xlu0 %834, %v777
        %v836 = vpop.permute.xlu0 %835
        %839 = vset.pattern.permute.xlu0 0
        %840 = vperm.xlu0 %839, %v778
        %v841 = vpop.permute.xlu0 %840
        %844 = vset.pattern.permute.xlu0 0
        %845 = vperm.xlu0 %844, %v779
        %v846 = vpop.permute.xlu0 %845
        %849 = vset.pattern.permute.xlu0 0
        %850 = vperm.xlu0 %849, %v780
        %v851 = vpop.permute.xlu0 %850
        %854 = vset.pattern.permute.xlu0 0
        %855 = vperm.xlu0 %854, %v781
        %v856 = vpop.permute.xlu0 %855
        %859 = vset.pattern.permute.xlu0 0
        %860 = vperm.xlu0 %859, %v782
        %v861 = vpop.permute.xlu0 %860
        %v879 = vunpack.c.l.b16 %v735
        %v880 = vunpack.c.l.b16 %v736
        %v881 = vunpack.c.l.b16 %v737
        %v882 = vunpack.c.l.b16 %v738
        %v883 = vunpack.c.l.b16 %v739
        %v884 = vunpack.c.l.b16 %v740
        %v885 = vunpack.c.l.b16 %v741
        %v886 = vunpack.c.l.b16 %v742
        %v887 = vunpack.c.l.b16 %v743
        %v888 = vunpack.c.l.b16 %v744
        %v889 = vunpack.c.l.b16 %v745
        %v890 = vunpack.c.l.b16 %v746
        %v891 = vunpack.c.l.b16 %v747
        %v892 = vunpack.c.l.b16 %v748
        %v893 = vunpack.c.l.b16 %v749
        %v894 = vunpack.c.l.b16 %v750
        %v895 = vpack.c.b16 %v880, %v879
        %v896 = vpack.c.b16 %v882, %v881
        %v897 = vpack.c.b16 %v884, %v883
        %v898 = vpack.c.b16 %v886, %v885
        %v899 = vpack.c.b16 %v888, %v887
        %v900 = vpack.c.b16 %v890, %v889
        %v901 = vpack.c.b16 %v892, %v891
        %v902 = vpack.c.b16 %v894, %v893
        %911 = vmatprep.subr.bf16.mxu0 %v752
        %912 = vmatpush1.bf16.msra.mxu0 %v751
        %913 = vmatprep.subr.bf16.mxu0 %v754
        %914 = vmatpush1.bf16.msra.mxu0 %v753
        %915 = vmatprep.subr.bf16.mxu0 %v756
        %916 = vmatpush1.bf16.msra.mxu0 %v755
        %917 = vmatprep.subr.bf16.mxu0 %v758
        %918 = vmatpush1.bf16.msra.mxu0 %v757
        %919 = vmatprep.subr.bf16.mxu0 %v760
        %920 = vmatpush1.bf16.msra.mxu0 %v759
        %921 = vmatprep.subr.bf16.mxu0 %v762
        %922 = vmatpush1.bf16.msra.mxu0 %v761
        %923 = vmatprep.subr.bf16.mxu0 %v764
        %924 = vmatpush1.bf16.msra.mxu0 %v763
        %925 = vmatprep.subr.bf16.mxu0 %v766
        %926 = vmatpush1.bf16.msra.mxu0 %v765
        %927 = vmatprep.subr.bf16.mxu0 0
        %928 = vmatpush1.bf16.msra.mxu0 0
        %929 = vmatprep.subr.bf16.mxu0 0
        %930 = vmatpush1.bf16.msra.mxu0 0
        %931 = vmatprep.subr.bf16.mxu0 0
        %932 = vmatpush1.bf16.msra.mxu0 0
        %933 = vmatprep.subr.bf16.mxu0 0
        %934 = vmatpush1.bf16.msra.mxu0 0
        %935 = vmatprep.subr.bf16.mxu0 0
        %936 = vmatpush1.bf16.msra.mxu0 0
        %937 = vmatprep.subr.bf16.mxu0 0
        %938 = vmatpush1.bf16.msra.mxu0 0
        %939 = vmatprep.subr.bf16.mxu0 0
        %940 = vmatpush1.bf16.msra.mxu0 0
        %941 = vmatprep.subr.bf16.mxu0 0
        %942 = vmatpush1.bf16.msra.mxu0 0
        %943 = vmatprep.mubr.bf16.mxu0 0
        %944 = vmatmul.mubr.bf16.gmra.mrb[0].mxu0 %v895
        %v945 = vpop.f32.mrb[0].mxu0
        %v946 = vadd.f32 %v786, %v945
        %v947 = vpop.f32.mrb[0].mxu0
        %v948 = vadd.f32 %v786, %v947
        %v949 = vpop.f32.mrb[0].mxu0
        %v950 = vadd.f32 %v791, %v949
        %v951 = vpop.f32.mrb[0].mxu0
        %v952 = vadd.f32 %v791, %v951
        %953 = vmatprep.mubr.bf16.mxu0 0
        %954 = vmatmul.mubr.bf16.gmra.mrb[0].mxu0 %v896
        %v955 = vpop.f32.mrb[0].mxu0
        %v956 = vadd.f32 %v796, %v955
        %v957 = vpop.f32.mrb[0].mxu0
        %v958 = vadd.f32 %v796, %v957
        %v959 = vpop.f32.mrb[0].mxu0
        %v960 = vadd.f32 %v801, %v959
        %v961 = vpop.f32.mrb[0].mxu0
        %v962 = vadd.f32 %v801, %v961
        %963 = vmatprep.mubr.bf16.mxu0 0
        %964 = vmatmul.mubr.bf16.gmra.mrb[0].mxu0 %v897
        %v965 = vpop.f32.mrb[0].mxu0
        %v966 = vadd.f32 %v806, %v965
        %v967 = vpop.f32.mrb[0].mxu0
        %v968 = vadd.f32 %v806, %v967
        %v969 = vpop.f32.mrb[0].mxu0
        %v970 = vadd.f32 %v811, %v969
        %v971 = vpop.f32.mrb[0].mxu0
        %v972 = vadd.f32 %v811, %v971
        %973 = vmatprep.mubr.bf16.mxu0 0
        %974 = vmatmul.mubr.bf16.gmra.mrb[0].mxu0 %v898
        %v975 = vpop.f32.mrb[0].mxu0
        %v976 = vadd.f32 %v816, %v975
        %v977 = vpop.f32.mrb[0].mxu0
        %v978 = vadd.f32 %v816, %v977
        %v979 = vpop.f32.mrb[0].mxu0
        %v980 = vadd.f32 %v821, %v979
        %v981 = vpop.f32.mrb[0].mxu0
        %v982 = vadd.f32 %v821, %v981
        %983 = vmatprep.mubr.bf16.mxu0 0
        %984 = vmatmul.mubr.bf16.gmra.mrb[0].mxu0 %v899
        %v985 = vpop.f32.mrb[0].mxu0
        %v986 = vadd.f32 %v826, %v985
        %v987 = vpop.f32.mrb[0].mxu0
        %v988 = vadd.f32 %v826, %v987
        %v989 = vpop.f32.mrb[0].mxu0
        %v990 = vadd.f32 %v831, %v989
        %v991 = vpop.f32.mrb[0].mxu0
        %v992 = vadd.f32 %v831, %v991
        %993 = vmatprep.mubr.bf16.mxu0 0
        %994 = vmatmul.mubr.bf16.gmra.mrb[0].mxu0 %v900
        %v995 = vpop.f32.mrb[0].mxu0
        %v996 = vadd.f32 %v836, %v995
        %v997 = vpop.f32.mrb[0].mxu0
        %v998 = vadd.f32 %v836, %v997
        %v999 = vpop.f32.mrb[0].mxu0
        %v1000 = vadd.f32 %v841, %v999
        %v1001 = vpop.f32.mrb[0].mxu0
        %v1002 = vadd.f32 %v841, %v1001
        %1003 = vmatprep.mubr.bf16.mxu0 0
        %1004 = vmatmul.mubr.bf16.gmra.mrb[0].mxu0 %v901
        %v1005 = vpop.f32.mrb[0].mxu0
        %v1006 = vadd.f32 %v846, %v1005
        %v1007 = vpop.f32.mrb[0].mxu0
        %v1008 = vadd.f32 %v846, %v1007
        %v1009 = vpop.f32.mrb[0].mxu0
        %v1010 = vadd.f32 %v851, %v1009
        %v1011 = vpop.f32.mrb[0].mxu0
        %v1012 = vadd.f32 %v851, %v1011
        %1013 = vmatprep.mubr.bf16.mxu0 0
        %1014 = vmatmul.mubr.bf16.gmra.mrb[0].mxu0 %v902
        %v1015 = vpop.f32.mrb[0].mxu0
        %v1016 = vadd.f32 %v856, %v1015
        %v1017 = vpop.f32.mrb[0].mxu0
        %v1018 = vadd.f32 %v856, %v1017
        %v1019 = vpop.f32.mrb[0].mxu0
        %v1020 = vadd.f32 %v861, %v1019
        %v1021 = vpop.f32.mrb[0].mxu0
        %v1022 = vadd.f32 %v861, %v1021
        %1023 = vdwg.mxu0
        %v1024 = vmax.f32 %v946, 0.0
        %v1025 = vmax.f32 %v948, 0.0
        %v1026 = vmax.f32 %v950, 0.0
        %v1027 = vmax.f32 %v952, 0.0
        %v1028 = vmax.f32 %v956, 0.0
        %v1029 = vmax.f32 %v958, 0.0
        %v1030 = vmax.f32 %v960, 0.0
        %v1031 = vmax.f32 %v962, 0.0
        %v1032 = vmax.f32 %v966, 0.0
        %v1033 = vmax.f32 %v968, 0.0
        %v1034 = vmax.f32 %v970, 0.0
        %v1035 = vmax.f32 %v972, 0.0
        %v1036 = vmax.f32 %v976, 0.0
        %v1037 = vmax.f32 %v978, 0.0
        %v1038 = vmax.f32 %v980, 0.0
        %v1039 = vmax.f32 %v982, 0.0
        %v1040 = vmax.f32 %v986, 0.0
        %v1041 = vmax.f32 %v988, 0.0
        %v1042 = vmax.f32 %v990, 0.0
        %v1043 = vmax.f32 %v992, 0.0
        %v1044 = vmax.f32 %v996, 0.0
        %v1045 = vmax.f32 %v998, 0.0
        %v1046 = vmax.f32 %v1000, 0.0
        %v1047 = vmax.f32 %v1002, 0.0
        %v1048 = vmax.f32 %v1006, 0.0
        %v1049 = vmax.f32 %v1008, 0.0
        %v1050 = vmax.f32 %v1010, 0.0
        %v1051 = vmax.f32 %v1012, 0.0
        %v1052 = vmax.f32 %v1016, 0.0
        %v1053 = vmax.f32 %v1018, 0.0
        %v1054 = vmax.f32 %v1020, 0.0
        %v1055 = vmax.f32 %v1022, 0.0
        %v1056 = vld [vmem:[%s5] sm:$0x1]
        %v1057 = vpack.c.bf16 %v1026, %v1024
        %v1058 = vpack.c.bf16 %v1027, %v1025
        %v1059 = vpack.c.bf16 %v1030, %v1028
        %v1060 = vpack.c.bf16 %v1031, %v1029
        %v1061 = vpack.c.bf16 %v1034, %v1032
        %v1062 = vpack.c.bf16 %v1035, %v1033
        %v1063 = vpack.c.bf16 %v1038, %v1036
        %v1064 = vpack.c.bf16 %v1039, %v1037
        %v1065 = vpack.c.bf16 %v1042, %v1040
        %v1066 = vpack.c.bf16 %v1043, %v1041
        %v1067 = vpack.c.bf16 %v1046, %v1044
        %v1068 = vpack.c.bf16 %v1047, %v1045
        %v1069 = vpack.c.bf16 %v1050, %v1048
        %v1070 = vpack.c.bf16 %v1051, %v1049
        %v1071 = vpack.c.bf16 %v1054, %v1052
        %v1072 = vpack.c.bf16 %v1055, %v1053
        %v1073 = vld [vmem:[%s6] sm:$0x3]
        %1075 = vset.pattern.permute.xlu0 0
        %1076 = vperm.xlu0 %1075, %v1073
        %v1077 = vpop.permute.xlu0 %1076
        %1079 = vmatprep.subr.bf16.mxu0 %v1058
        %1080 = vmatpush1.bf16.msra.mxu0 %v1057
        %1081 = vmatprep.subr.bf16.mxu0 %v1060
        %1082 = vmatpush1.bf16.msra.mxu0 %v1059
        %1083 = vmatprep.subr.bf16.mxu0 %v1062
        %1084 = vmatpush1.bf16.msra.mxu0 %v1061
        %1085 = vmatprep.subr.bf16.mxu0 %v1064
        %1086 = vmatpush1.bf16.msra.mxu0 %v1063
        %1087 = vmatprep.subr.bf16.mxu0 %v1066
        %1088 = vmatpush1.bf16.msra.mxu0 %v1065
        %1089 = vmatprep.subr.bf16.mxu0 %v1068
        %1090 = vmatpush1.bf16.msra.mxu0 %v1067
        %1091 = vmatprep.subr.bf16.mxu0 %v1070
        %1092 = vmatpush1.bf16.msra.mxu0 %v1069
        %1093 = vmatprep.subr.bf16.mxu0 %v1072
        %1094 = vmatpush1.bf16.msra.mxu0 %v1071
        %1095 = vmatprep.subr.bf16.mxu0 0
        %1096 = vmatpush1.bf16.msra.mxu0 0
        %1097 = vmatprep.subr.bf16.mxu0 0
        %1098 = vmatpush1.bf16.msra.mxu0 0
        %1099 = vmatprep.subr.bf16.mxu0 0
        %1100 = vmatpush1.bf16.msra.mxu0 0
        %1101 = vmatprep.subr.bf16.mxu0 0
        %1102 = vmatpush1.bf16.msra.mxu0 0
        %1103 = vmatprep.subr.bf16.mxu0 0
        %1104 = vmatpush1.bf16.msra.mxu0 0
        %1105 = vmatprep.subr.bf16.mxu0 0
        %1106 = vmatpush1.bf16.msra.mxu0 0
        %1107 = vmatprep.subr.bf16.mxu0 0
        %1108 = vmatpush1.bf16.msra.mxu0 0
        %1109 = vmatprep.subr.bf16.mxu0 0
        %1110 = vmatpush1.bf16.msra.mxu0 0
        %1111 = vmatprep.mubr.bf16.mxu0 0
        %1112 = vmatmul.mubr.bf16.gmra.mrb[0].mxu0 %v1056
        %v1113 = vpop.f32.mrb[0].mxu0
        %v1114 = vadd.f32 %v1077, %v1113
        %v1115 = vpop.f32.mrb[0].mxu0
        %v1116 = vadd.f32 %v1077, %v1115
        %v1117 = vpop.f32.mrb[0].mxu0
        %v1118 = vpop.f32.mrb[0].mxu0
        %1119 = vdwg.mxu0
        %v1122 = vcombine.low %v1114, %v1116
        %v1124 = vunpack.c.l.s4 1983009808
        %v1125 = vunpack.c.0.s8 %v1124
        %v1126 = vlaneseq
        %v1127 = vshrl.u32 %v1126, 7
        %v1128 = vsub.s32 %v1125, %v1127
        %v1129 = vrot.slane %v1122, %v1128
        %1131 = vst [vmem:[%s272] sm:$0xf] %v1129
        %s1132 = sand.u32 %s181, 1
        %s1133 = scalar_lea.sflag [#allocation3], %s1132
        %s1134 = sand.u32 %s181, 1
        %s1135 = smul.addr %s1134, 4
        %s1136 = scalar_lea.vmem [#allocation2], %s1135
        // Predicated region
        $region49: #{tpu_custom_call.1} parent=47 // pred_check
          %p1137 = pneg %p191
        $region50: #{tpu_custom_call.1} parent=47 // pred_check_branch
          %1139 = sbr.rel (%p1137) target = $region52
        $region51: #{tpu_custom_call.1} parent=47 // pred_region
          %s1140 = smul.u32 2, %s21
          %s1142 = ssub.s32 64, 64
          %1143 = vsyncadd %s1133, %s1142
          %s1144 = smul.addr %s1140, 32
          %s1145 = scalar_lea.hbm %s7, %s1144
          %s1147 = sshll.u32 %s1136, 4
          %s1148 = int_to_ptr.vmem [resolvable:$true] %s1147
          %1150 = dma.vmem_to_hbm [thread:$0]  %s1148, 64, %s1145, %s1133
        $region52: #{tpu_custom_call.1} parent=47 // pred_fallthru
          _
      $region48: #{tpu_custom_call.1} parent=5 // pred_fallthru
        _
      %p1151 = scmp.le.s32.totalorder 2, %s16
      // Predicated region
      $region53: #{tpu_custom_call.1} parent=5 // pred_check
        %p1152 = pneg %p1151
      $region54: #{tpu_custom_call.1} parent=5 // pred_check_branch
        %1154 = sbr.rel (%p1152) target = $region56
      $region55: #{tpu_custom_call.1} parent=5 // pred_region
        %s1155 = ssub.s32 %s16, 2
        // Predicated region
        $region57: #{tpu_custom_call.1} parent=55 // pred_check
          %p1156 = pneg %p197
        $region58: #{tpu_custom_call.1} parent=55 // pred_check_branch
          %1158 = sbr.rel (%p1156) target = $region60
        $region59: #{tpu_custom_call.1} parent=55 // pred_region
          %s1159 = sand.u32 %s182, 1
          %s1160 = scalar_lea.sflag [#allocation3], %s1159
          %s1161 = sand.u32 %s182, 1
          %s1162 = smul.addr %s1161, 4
          %s1163 = scalar_lea.vmem [#allocation2], %s1162
          %1164 = dma.done %s1160, 64
        $region60: #{tpu_custom_call.1} parent=55 // pred_fallthru
          _
      $region56: #{tpu_custom_call.1} parent=5 // pred_fallthru
        _
    $region6: #{tpu_custom_call.1} parent=1 // loop_footer
      %s20 = sadd.s32 1, %s16
    $region7: #{tpu_custom_call.1} parent=1 // loop_footer_branch
      %15 = sbr.rel target = $region3
    $region8: #{tpu_custom_call.1} parent=1 // loop_exit
      _
    %1165 = vsyncpa [#allocation3], 1
    %s1166 = scalar_lea.sflag [#allocation3], 1
    %1167 = vsyncpa %s1166, 1

</llo_original>
